<compile_context>
chip_gen: v7x
topology: tpu7x:2x2x1
jax: 0.10.0
libtpu: 0.0.40
codegen_flags: <defaults>
</compile_context>

<pallas_src>
import functools

import jax
import jax.numpy as jnp
from jax import lax
from jax.experimental import pallas as pl
from jax.experimental.pallas import tpu as pltpu

EPS = 1e-5


def _resnet_block_kernel(x_ref, coords_ref, w1_ref, b1_ref, w2_ref, b2_ref, o_ref, *, H, W):
    # x_ref:      (1, C, H*W) f32   -- spatial flattened on the lane axis
    # coords_ref: (2, H*W)    int32 -- row 0: h index, row 1: w index (reflect fixes)
    # w_ref:      (C, 9*C)    matmul dtype (im2col weight matrix, tap-major / ci-minor)
    # b_ref:      (C, 1)      f32
    C = x_ref.shape[1]
    HW = H * W
    mm_dtype = w1_ref.dtype

    x = x_ref[0]                                     # (C, HW) f32, lane-dense

    # Boundary masks, computed once and shared by both convs.
    row = coords_ref[0:1, :]                         # (1, HW)
    col = coords_ref[1:2, :]
    row_first = row == 0
    row_last = row == H - 1
    col_first = col == 0
    col_last = col == W - 1

    def conv3x3(a, w_ref, b_ref):
        # Row-shifted variants via XLU rolls on the flattened spatial axis.
        # pltpu.roll(a, s)[p] == a[p - s mod HW]  (jnp.roll convention).
        up = pltpu.roll(a, W, axis=1)                # [h, w] <- a[h-1, w] (wraps at h=0)
        down = pltpu.roll(a, HW - W, axis=1)         # [h, w] <- a[h+1, w] (wraps at h=H-1)
        row_shifted = (
            jnp.where(row_first, down, up),          # dy=-1: reflect row -1 -> row 1
            a,                                       # dy= 0
            jnp.where(row_last, up, down),           # dy=+1: reflect row H  -> row H-2
        )
        taps = []
        for ar in row_shifted:
            left = pltpu.roll(ar, 1, axis=1)         # [h, w] <- ar[h, w-1]
            right = pltpu.roll(ar, HW - 1, axis=1)   # [h, w] <- ar[h, w+1]
            # Cast each tap to the MXU operand dtype BEFORE the concat: half the
            # concat bandwidth / im2col VMEM in bf16 mode; a no-op in f32 mode.
            taps.append(jnp.where(col_first, right, left).astype(mm_dtype))  # dx=-1
            taps.append(ar.astype(mm_dtype))                                  # dx= 0
            taps.append(jnp.where(col_last, left, right).astype(mm_dtype))    # dx=+1
        # im2col matrix (9C, HW); a single MXU matmul does all accumulation in f32.
        cols = jnp.concatenate(taps, axis=0)
        y = jnp.dot(w_ref[...], cols, preferred_element_type=jnp.float32)  # (C, HW)
        return y + b_ref[...]                        # hoisted (C,1) broadcast, added once

    def instance_norm(a):
        # Per-channel stats over the lane (spatial) axis; biased variance, eps inside
        # rsqrt (matches nn.InstanceNorm2d(affine=False)). rsqrt -> EUP (free slot).
        mu = jnp.mean(a, axis=1, keepdims=True)
        var = jnp.mean((a - mu) * (a - mu), axis=1, keepdims=True)
        return (a - mu) * lax.rsqrt(var + EPS)

    h = conv3x3(x, w1_ref, b1_ref)
    h = jnp.maximum(instance_norm(h), 0.0)           # ReLU (f32 elementwise on all chips)
    h = conv3x3(h, w2_ref, b2_ref)
    h = instance_norm(h)
    o_ref[0] = (x + h).astype(o_ref.dtype)           # residual; lane-dense (C, HW) store


def resnet_block(x_nchw, w1, b1, w2, b2, *, matmul_dtype=jnp.bfloat16):
    """ResnetBlock forward. x_nchw: (N,C,H,W) f32; w: (3,3,C_in,C_out) HWIO; b: (C,)."""
    N, C, H, W = x_nchw.shape
    HW = H * W

    # Free (contiguous minor-dim merge) reshape -- no HBM relayout pass, no transposes.
    x_flat = x_nchw.reshape(N, C, HW)

    # im2col weight matrices: (C_out, 9*C_in), tap-major / input-channel-minor, matching
    # the tap order built in the kernel. Bias reshaped once (broadcast hoisted out of kernel).
    w1_mat = w1.reshape(9 * C, C).T.astype(matmul_dtype)
    w2_mat = w2.reshape(9 * C, C).T.astype(matmul_dtype)
    b1r = b1.reshape(C, 1).astype(jnp.float32)
    b2r = b2.reshape(C, 1).astype(jnp.float32)

    # Spatial coordinate map (tiny, built once in XLA) used for the reflect-boundary selects.
    row_idx = jnp.repeat(jnp.arange(H, dtype=jnp.int32), W)
    col_idx = jnp.tile(jnp.arange(W, dtype=jnp.int32), H)
    coords = jnp.stack([row_idx, col_idx])           # (2, HW) int32

    kernel = functools.partial(_resnet_block_kernel, H=H, W=W)

    # TODO(synk): for production CycleGAN shapes (C=256, H=W>=64) add an H-row tile grid
    # axis with a 1-row halo and a two-pass (or Welford-merge) InstanceNorm, and re-budget
    # VMEM (v7x has only 64 MiB physical per TC).
    out_flat = pl.pallas_call(
        kernel,
        out_shape=jax.ShapeDtypeStruct((N, C, HW), x_nchw.dtype),
        grid_spec=pltpu.PrefetchScalarGridSpec(
            num_scalar_prefetch=0,
            grid=(N,),
            in_specs=[
                pl.BlockSpec((1, C, HW), lambda n: (n, 0, 0)),
                pl.BlockSpec((2, HW), lambda n: (0, 0)),
                pl.BlockSpec((C, 9 * C), lambda n: (0, 0)),
                pl.BlockSpec((C, 1), lambda n: (0, 0)),
                pl.BlockSpec((C, 9 * C), lambda n: (0, 0)),
                pl.BlockSpec((C, 1), lambda n: (0, 0)),
            ],
            out_specs=pl.BlockSpec((1, C, HW), lambda n: (n, 0, 0)),
        ),
        compiler_params=pltpu.CompilerParams(
            dimension_semantics=("parallel",),       # independent batch -> 2 TCs on v7x
            vmem_limit_bytes=32 * 1024 * 1024,
        ),
    )(x_flat, coords, w1_mat, b1r, w2_mat, b2r)

    return out_flat.reshape(N, C, H, W)


def resnet_block_reference(x_nchw, w1, b1, w2, b2):
    """Pure-JAX reference (NCHW, same semantics as the PyTorch module)."""
    C = x_nchw.shape[1]

    def conv(a, w_hwio, b):
        ap = jnp.pad(a, ((0, 0), (0, 0), (1, 1), (1, 1)), mode="reflect")
        w_oihw = jnp.transpose(w_hwio, (3, 2, 0, 1))
        y = lax.conv_general_dilated(
            ap, w_oihw, window_strides=(1, 1), padding="VALID",
            dimension_numbers=("NCHW", "OIHW", "NCHW"))
        return y + b.reshape(1, C, 1, 1)

    def inorm(a):
        mu = jnp.mean(a, axis=(2, 3), keepdims=True)
        var = jnp.mean((a - mu) ** 2, axis=(2, 3), keepdims=True)
        return (a - mu) * lax.rsqrt(var + EPS)

    h = jnp.maximum(inorm(conv(x_nchw, w1, b1)), 0.0)
    h = inorm(conv(h, w2, b2))
    return x_nchw + h


if __name__ == "__main__":
    N, C, H, W = 2, 4, 16, 16   # small shapes consistent with ResnetBlock(dim=4)

    key = jax.random.PRNGKey(0)
    kx, kw1, kb1, kw2, kb2 = jax.random.split(key, 5)
    x = jax.random.normal(kx, (N, C, H, W), dtype=jnp.float32)
    # Conv weights stored HWIO: (3, 3, C_in, C_out); biases: (C,)
    w1 = 0.1 * jax.random.normal(kw1, (3, 3, C, C), dtype=jnp.float32)
    b1 = 0.1 * jax.random.normal(kb1, (C,), dtype=jnp.float32)
    w2 = 0.1 * jax.random.normal(kw2, (3, 3, C, C), dtype=jnp.float32)
    b2 = 0.1 * jax.random.normal(kb2, (C,), dtype=jnp.float32)

    ref = jax.block_until_ready(resnet_block_reference(x, w1, b1, w2, b2))

    # f32 MXU operands: tight check against the reference.
    out_f32 = jax.block_until_ready(
        resnet_block(x, w1, b1, w2, b2, matmul_dtype=jnp.float32))
    assert out_f32.shape == (N, C, H, W)
    assert jnp.allclose(out_f32, ref, atol=1e-3, rtol=1e-3), "f32 kernel mismatch vs reference"

    # Default path (bf16 MXU operands, f32 accumulate + f32 norm/ReLU): looser tolerance.
    out_bf16 = jax.block_until_ready(resnet_block(x, w1, b1, w2, b2))
    assert jnp.allclose(out_bf16, ref, atol=3e-2, rtol=3e-2), "bf16 kernel mismatch vs reference"

    print("KERNEL_OK")
</pallas_src>

<mosaic_0001>
module attributes {stable_mosaic.version = 11 : i64} {
  func.func @_resnet_block_kernel(%arg0: i32, %arg1: memref<1x4x256xf32, #tpu.memory_space<vmem>>, %arg2: memref<2x256xi32, #tpu.memory_space<vmem>>, %arg3: memref<4x36xf32, #tpu.memory_space<vmem>>, %arg4: memref<4x1xf32, #tpu.memory_space<vmem>>, %arg5: memref<4x36xf32, #tpu.memory_space<vmem>>, %arg6: memref<4x1xf32, #tpu.memory_space<vmem>>, %arg7: memref<1x4x256xf32, #tpu.memory_space<vmem>>) attributes {dimension_semantics = [#tpu.dimension_semantics<parallel>], iteration_bounds = array<i64: 2>, scalar_prefetch = 0 : i64, scratch_operands = 0 : i64, tpu.core_type = #tpu.core_type<tc>, window_params = [{transform_indices = @transform_0, window_bounds = array<i64: 1, 4, 256>}, {pipeline_mode = #tpu.pipeline_mode<synchronous>, transform_indices = @transform_1, window_bounds = array<i64: 2, 256>}, {pipeline_mode = #tpu.pipeline_mode<synchronous>, transform_indices = @transform_2, window_bounds = array<i64: 4, 36>}, {pipeline_mode = #tpu.pipeline_mode<synchronous>, transform_indices = @transform_3, window_bounds = array<i64: 4, 1>}, {pipeline_mode = #tpu.pipeline_mode<synchronous>, transform_indices = @transform_4, window_bounds = array<i64: 4, 36>}, {pipeline_mode = #tpu.pipeline_mode<synchronous>, transform_indices = @transform_5, window_bounds = array<i64: 4, 1>}, {transform_indices = @transform_6, window_bounds = array<i64: 1, 4, 256>}]} {
    %c0 = arith.constant 0 : index
    %c0_0 = arith.constant 0 : index
    %c0_1 = arith.constant 0 : index
    %0 = vector.load %arg1[%c0, %c0_0, %c0_1] : memref<1x4x256xf32, #tpu.memory_space<vmem>>, vector<1x4x256xf32>
    %1 = vector.shape_cast %0 : vector<1x4x256xf32> to vector<4x256xf32>
    %c0_2 = arith.constant 0 : index
    %c0_3 = arith.constant 0 : index
    %2 = vector.load %arg2[%c0_2, %c0_3] : memref<2x256xi32, #tpu.memory_space<vmem>>, vector<1x256xi32>
    %c1 = arith.constant 1 : index
    %c0_4 = arith.constant 0 : index
    %3 = vector.load %arg2[%c1, %c0_4] : memref<2x256xi32, #tpu.memory_space<vmem>>, vector<1x256xi32>
    %c0_i32 = arith.constant 0 : i32
    %4 = vector.broadcast %c0_i32 : i32 to vector<1x256xi32>
    %5 = arith.cmpi eq, %2, %4 : vector<1x256xi32>
    %c15_i32 = arith.constant 15 : i32
    %6 = vector.broadcast %c15_i32 : i32 to vector<1x256xi32>
    %7 = arith.cmpi eq, %2, %6 : vector<1x256xi32>
    %c0_i32_5 = arith.constant 0 : i32
    %8 = vector.broadcast %c0_i32_5 : i32 to vector<1x256xi32>
    %9 = arith.cmpi eq, %3, %8 : vector<1x256xi32>
    %c15_i32_6 = arith.constant 15 : i32
    %10 = vector.broadcast %c15_i32_6 : i32 to vector<1x256xi32>
    %11 = arith.cmpi eq, %3, %10 : vector<1x256xi32>
    %c16_i32 = arith.constant 16 : i32
    %12 = tpu.dynamic_rotate %1 by %c16_i32 dim 1 : vector<4x256xf32>, i32 -> vector<4x256xf32>
    %c240_i32 = arith.constant 240 : i32
    %13 = tpu.dynamic_rotate %1 by %c240_i32 dim 1 : vector<4x256xf32>, i32 -> vector<4x256xf32>
    %14 = vector.shape_cast %5 : vector<1x256xi1> to vector<1x256xi1>
    %15 = vector.broadcast %14 : vector<1x256xi1> to vector<4x256xi1>
    %16 = arith.select %15, %13, %12 : vector<4x256xi1>, vector<4x256xf32>
    %17 = vector.shape_cast %7 : vector<1x256xi1> to vector<1x256xi1>
    %18 = vector.broadcast %17 : vector<1x256xi1> to vector<4x256xi1>
    %19 = arith.select %18, %12, %13 : vector<4x256xi1>, vector<4x256xf32>
    %c1_i32 = arith.constant 1 : i32
    %20 = tpu.dynamic_rotate %16 by %c1_i32 dim 1 : vector<4x256xf32>, i32 -> vector<4x256xf32>
    %c255_i32 = arith.constant 255 : i32
    %21 = tpu.dynamic_rotate %16 by %c255_i32 dim 1 : vector<4x256xf32>, i32 -> vector<4x256xf32>
    %22 = vector.shape_cast %9 : vector<1x256xi1> to vector<1x256xi1>
    %23 = vector.broadcast %22 : vector<1x256xi1> to vector<4x256xi1>
    %24 = arith.select %23, %21, %20 : vector<4x256xi1>, vector<4x256xf32>
    %25 = vector.shape_cast %11 : vector<1x256xi1> to vector<1x256xi1>
    %26 = vector.broadcast %25 : vector<1x256xi1> to vector<4x256xi1>
    %27 = arith.select %26, %20, %21 : vector<4x256xi1>, vector<4x256xf32>
    %c1_i32_7 = arith.constant 1 : i32
    %28 = tpu.dynamic_rotate %1 by %c1_i32_7 dim 1 : vector<4x256xf32>, i32 -> vector<4x256xf32>
    %c255_i32_8 = arith.constant 255 : i32
    %29 = tpu.dynamic_rotate %1 by %c255_i32_8 dim 1 : vector<4x256xf32>, i32 -> vector<4x256xf32>
    %30 = vector.shape_cast %9 : vector<1x256xi1> to vector<1x256xi1>
    %31 = vector.broadcast %30 : vector<1x256xi1> to vector<4x256xi1>
    %32 = arith.select %31, %29, %28 : vector<4x256xi1>, vector<4x256xf32>
    %33 = vector.shape_cast %11 : vector<1x256xi1> to vector<1x256xi1>
    %34 = vector.broadcast %33 : vector<1x256xi1> to vector<4x256xi1>
    %35 = arith.select %34, %28, %29 : vector<4x256xi1>, vector<4x256xf32>
    %c1_i32_9 = arith.constant 1 : i32
    %36 = tpu.dynamic_rotate %19 by %c1_i32_9 dim 1 : vector<4x256xf32>, i32 -> vector<4x256xf32>
    %c255_i32_10 = arith.constant 255 : i32
    %37 = tpu.dynamic_rotate %19 by %c255_i32_10 dim 1 : vector<4x256xf32>, i32 -> vector<4x256xf32>
    %38 = vector.shape_cast %9 : vector<1x256xi1> to vector<1x256xi1>
    %39 = vector.broadcast %38 : vector<1x256xi1> to vector<4x256xi1>
    %40 = arith.select %39, %37, %36 : vector<4x256xi1>, vector<4x256xf32>
    %41 = vector.shape_cast %11 : vector<1x256xi1> to vector<1x256xi1>
    %42 = vector.broadcast %41 : vector<1x256xi1> to vector<4x256xi1>
    %43 = arith.select %42, %36, %37 : vector<4x256xi1>, vector<4x256xf32>
    %44 = tpu.concatenate %24, %16, %27, %32, %1, %35, %40, %19, %43 in 0 : vector<4x256xf32>, vector<4x256xf32>, vector<4x256xf32>, vector<4x256xf32>, vector<4x256xf32>, vector<4x256xf32>, vector<4x256xf32>, vector<4x256xf32>, vector<4x256xf32> -> vector<36x256xf32>
    %c0_11 = arith.constant 0 : index
    %c0_12 = arith.constant 0 : index
    %45 = vector.load %arg3[%c0_11, %c0_12] : memref<4x36xf32, #tpu.memory_space<vmem>>, vector<4x36xf32>
    %cst = arith.constant dense<0.000000e+00> : vector<4x256xf32>
    %46 = tpu.matmul %45, %44, %cst {dimension_numbers = #tpu.dot_dimension_numbers<[1], [0], [0], [1], [0, 0, 1, 1], [], []>} : vector<4x36xf32>, vector<36x256xf32>, vector<4x256xf32> -> vector<4x256xf32>
    %c0_13 = arith.constant 0 : index
    %c0_14 = arith.constant 0 : index
    %47 = vector.load %arg4[%c0_13, %c0_14] : memref<4x1xf32, #tpu.memory_space<vmem>>, vector<4x1xf32>
    %48 = vector.broadcast %47 : vector<4x1xf32> to vector<4x256xf32>
    %49 = arith.addf %46, %48 : vector<4x256xf32>
    %cst_15 = arith.constant dense<0.000000e+00> : vector<4xf32>
    %50 = vector.multi_reduction <add>, %49, %cst_15 [1] : vector<4x256xf32> to vector<4xf32>
    %51 = vector.shape_cast %50 : vector<4xf32> to vector<4x1xf32>
    %cst_16 = arith.constant 2.560000e+02 : f32
    %52 = vector.broadcast %cst_16 : f32 to vector<4x1xf32>
    %53 = arith.divf %51, %52 : vector<4x1xf32>
    %54 = vector.broadcast %53 : vector<4x1xf32> to vector<4x256xf32>
    %55 = arith.subf %49, %54 : vector<4x256xf32>
    %56 = vector.broadcast %53 : vector<4x1xf32> to vector<4x256xf32>
    %57 = arith.subf %49, %56 : vector<4x256xf32>
    %58 = arith.mulf %55, %57 : vector<4x256xf32>
    %cst_17 = arith.constant dense<0.000000e+00> : vector<4xf32>
    %59 = vector.multi_reduction <add>, %58, %cst_17 [1] : vector<4x256xf32> to vector<4xf32>
    %60 = vector.shape_cast %59 : vector<4xf32> to vector<4x1xf32>
    %cst_18 = arith.constant 2.560000e+02 : f32
    %61 = vector.broadcast %cst_18 : f32 to vector<4x1xf32>
    %62 = arith.divf %60, %61 : vector<4x1xf32>
    %63 = vector.broadcast %53 : vector<4x1xf32> to vector<4x256xf32>
    %64 = arith.subf %49, %63 : vector<4x256xf32>
    %cst_19 = arith.constant 9.99999974E-6 : f32
    %65 = vector.broadcast %cst_19 : f32 to vector<4x1xf32>
    %66 = arith.addf %62, %65 : vector<4x1xf32>
    %67 = math.rsqrt %66 : vector<4x1xf32>
    %68 = vector.broadcast %67 : vector<4x1xf32> to vector<4x256xf32>
    %69 = arith.mulf %64, %68 : vector<4x256xf32>
    %cst_20 = arith.constant 0.000000e+00 : f32
    %70 = vector.broadcast %cst_20 : f32 to vector<4x256xf32>
    %71 = arith.maximumf %69, %70 : vector<4x256xf32>
    %c16_i32_21 = arith.constant 16 : i32
    %72 = tpu.dynamic_rotate %71 by %c16_i32_21 dim 1 : vector<4x256xf32>, i32 -> vector<4x256xf32>
    %c240_i32_22 = arith.constant 240 : i32
    %73 = tpu.dynamic_rotate %71 by %c240_i32_22 dim 1 : vector<4x256xf32>, i32 -> vector<4x256xf32>
    %74 = vector.shape_cast %5 : vector<1x256xi1> to vector<1x256xi1>
    %75 = vector.broadcast %74 : vector<1x256xi1> to vector<4x256xi1>
    %76 = arith.select %75, %73, %72 : vector<4x256xi1>, vector<4x256xf32>
    %77 = vector.shape_cast %7 : vector<1x256xi1> to vector<1x256xi1>
    %78 = vector.broadcast %77 : vector<1x256xi1> to vector<4x256xi1>
    %79 = arith.select %78, %72, %73 : vector<4x256xi1>, vector<4x256xf32>
    %c1_i32_23 = arith.constant 1 : i32
    %80 = tpu.dynamic_rotate %76 by %c1_i32_23 dim 1 : vector<4x256xf32>, i32 -> vector<4x256xf32>
    %c255_i32_24 = arith.constant 255 : i32
    %81 = tpu.dynamic_rotate %76 by %c255_i32_24 dim 1 : vector<4x256xf32>, i32 -> vector<4x256xf32>
    %82 = vector.shape_cast %9 : vector<1x256xi1> to vector<1x256xi1>
    %83 = vector.broadcast %82 : vector<1x256xi1> to vector<4x256xi1>
    %84 = arith.select %83, %81, %80 : vector<4x256xi1>, vector<4x256xf32>
    %85 = vector.shape_cast %11 : vector<1x256xi1> to vector<1x256xi1>
    %86 = vector.broadcast %85 : vector<1x256xi1> to vector<4x256xi1>
    %87 = arith.select %86, %80, %81 : vector<4x256xi1>, vector<4x256xf32>
    %c1_i32_25 = arith.constant 1 : i32
    %88 = tpu.dynamic_rotate %71 by %c1_i32_25 dim 1 : vector<4x256xf32>, i32 -> vector<4x256xf32>
    %c255_i32_26 = arith.constant 255 : i32
    %89 = tpu.dynamic_rotate %71 by %c255_i32_26 dim 1 : vector<4x256xf32>, i32 -> vector<4x256xf32>
    %90 = vector.shape_cast %9 : vector<1x256xi1> to vector<1x256xi1>
    %91 = vector.broadcast %90 : vector<1x256xi1> to vector<4x256xi1>
    %92 = arith.select %91, %89, %88 : vector<4x256xi1>, vector<4x256xf32>
    %93 = vector.shape_cast %11 : vector<1x256xi1> to vector<1x256xi1>
    %94 = vector.broadcast %93 : vector<1x256xi1> to vector<4x256xi1>
    %95 = arith.select %94, %88, %89 : vector<4x256xi1>, vector<4x256xf32>
    %c1_i32_27 = arith.constant 1 : i32
    %96 = tpu.dynamic_rotate %79 by %c1_i32_27 dim 1 : vector<4x256xf32>, i32 -> vector<4x256xf32>
    %c255_i32_28 = arith.constant 255 : i32
    %97 = tpu.dynamic_rotate %79 by %c255_i32_28 dim 1 : vector<4x256xf32>, i32 -> vector<4x256xf32>
    %98 = vector.shape_cast %9 : vector<1x256xi1> to vector<1x256xi1>
    %99 = vector.broadcast %98 : vector<1x256xi1> to vector<4x256xi1>
    %100 = arith.select %99, %97, %96 : vector<4x256xi1>, vector<4x256xf32>
    %101 = vector.shape_cast %11 : vector<1x256xi1> to vector<1x256xi1>
    %102 = vector.broadcast %101 : vector<1x256xi1> to vector<4x256xi1>
    %103 = arith.select %102, %96, %97 : vector<4x256xi1>, vector<4x256xf32>
    %104 = tpu.concatenate %84, %76, %87, %92, %71, %95, %100, %79, %103 in 0 : vector<4x256xf32>, vector<4x256xf32>, vector<4x256xf32>, vector<4x256xf32>, vector<4x256xf32>, vector<4x256xf32>, vector<4x256xf32>, vector<4x256xf32>, vector<4x256xf32> -> vector<36x256xf32>
    %c0_29 = arith.constant 0 : index
    %c0_30 = arith.constant 0 : index
    %105 = vector.load %arg5[%c0_29, %c0_30] : memref<4x36xf32, #tpu.memory_space<vmem>>, vector<4x36xf32>
    %cst_31 = arith.constant dense<0.000000e+00> : vector<4x256xf32>
    %106 = tpu.matmul %105, %104, %cst_31 {dimension_numbers = #tpu.dot_dimension_numbers<[1], [0], [0], [1], [0, 0, 1, 1], [], []>} : vector<4x36xf32>, vector<36x256xf32>, vector<4x256xf32> -> vector<4x256xf32>
    %c0_32 = arith.constant 0 : index
    %c0_33 = arith.constant 0 : index
    %107 = vector.load %arg6[%c0_32, %c0_33] : memref<4x1xf32, #tpu.memory_space<vmem>>, vector<4x1xf32>
    %108 = vector.broadcast %107 : vector<4x1xf32> to vector<4x256xf32>
    %109 = arith.addf %106, %108 : vector<4x256xf32>
    %cst_34 = arith.constant dense<0.000000e+00> : vector<4xf32>
    %110 = vector.multi_reduction <add>, %109, %cst_34 [1] : vector<4x256xf32> to vector<4xf32>
    %111 = vector.shape_cast %110 : vector<4xf32> to vector<4x1xf32>
    %cst_35 = arith.constant 2.560000e+02 : f32
    %112 = vector.broadcast %cst_35 : f32 to vector<4x1xf32>
    %113 = arith.divf %111, %112 : vector<4x1xf32>
    %114 = vector.broadcast %113 : vector<4x1xf32> to vector<4x256xf32>
    %115 = arith.subf %109, %114 : vector<4x256xf32>
    %116 = vector.broadcast %113 : vector<4x1xf32> to vector<4x256xf32>
    %117 = arith.subf %109, %116 : vector<4x256xf32>
    %118 = arith.mulf %115, %117 : vector<4x256xf32>
    %cst_36 = arith.constant dense<0.000000e+00> : vector<4xf32>
    %119 = vector.multi_reduction <add>, %118, %cst_36 [1] : vector<4x256xf32> to vector<4xf32>
    %120 = vector.shape_cast %119 : vector<4xf32> to vector<4x1xf32>
    %cst_37 = arith.constant 2.560000e+02 : f32
    %121 = vector.broadcast %cst_37 : f32 to vector<4x1xf32>
    %122 = arith.divf %120, %121 : vector<4x1xf32>
    %123 = vector.broadcast %113 : vector<4x1xf32> to vector<4x256xf32>
    %124 = arith.subf %109, %123 : vector<4x256xf32>
    %cst_38 = arith.constant 9.99999974E-6 : f32
    %125 = vector.broadcast %cst_38 : f32 to vector<4x1xf32>
    %126 = arith.addf %122, %125 : vector<4x1xf32>
    %127 = math.rsqrt %126 : vector<4x1xf32>
    %128 = vector.broadcast %127 : vector<4x1xf32> to vector<4x256xf32>
    %129 = arith.mulf %124, %128 : vector<4x256xf32>
    %130 = arith.addf %1, %129 : vector<4x256xf32>
    %c0_39 = arith.constant 0 : index
    %c0_40 = arith.constant 0 : index
    %c0_41 = arith.constant 0 : index
    %131 = vector.load %arg7[%c0_39, %c0_40, %c0_41] : memref<1x4x256xf32, #tpu.memory_space<vmem>>, vector<1x4x256xf32>
    %132 = vector.shape_cast %131 : vector<1x4x256xf32> to vector<4x256xf32>
    %133 = vector.shape_cast %130 : vector<4x256xf32> to vector<1x4x256xf32>
    tpu.vector_store %arg7[%c0_39, %c0_40, %c0_41], %133 {strides = array<i32>} : memref<1x4x256xf32, #tpu.memory_space<vmem>>, vector<1x4x256xf32>,
    return
  }
  func.func @transform_0(%arg0: i32) -> (i32, i32, i32) {
    %c0_i32 = arith.constant 0 : i32
    %c0_i32_0 = arith.constant 0 : i32
    %c0_i32_1 = arith.constant 0 : i32
    return %arg0, %c0_i32, %c0_i32_0 : i32, i32, i32
  }
  func.func @transform_1(%arg0: i32) -> (i32, i32) {
    %c0_i32 = arith.constant 0 : i32
    %c0_i32_0 = arith.constant 0 : i32
    %c0_i32_1 = arith.constant 0 : i32
    return %c0_i32, %c0_i32_0 : i32, i32
  }
  func.func @transform_2(%arg0: i32) -> (i32, i32) {
    %c0_i32 = arith.constant 0 : i32
    %c0_i32_0 = arith.constant 0 : i32
    %c0_i32_1 = arith.constant 0 : i32
    return %c0_i32, %c0_i32_0 : i32, i32
  }
  func.func @transform_3(%arg0: i32) -> (i32, i32) {
    %c0_i32 = arith.constant 0 : i32
    %c0_i32_0 = arith.constant 0 : i32
    %c0_i32_1 = arith.constant 0 : i32
    return %c0_i32, %c0_i32_0 : i32, i32
  }
  func.func @transform_4(%arg0: i32) -> (i32, i32) {
    %c0_i32 = arith.constant 0 : i32
    %c0_i32_0 = arith.constant 0 : i32
    %c0_i32_1 = arith.constant 0 : i32
    return %c0_i32, %c0_i32_0 : i32, i32
  }
  func.func @transform_5(%arg0: i32) -> (i32, i32) {
    %c0_i32 = arith.constant 0 : i32
    %c0_i32_0 = arith.constant 0 : i32
    %c0_i32_1 = arith.constant 0 : i32
    return %c0_i32, %c0_i32_0 : i32, i32
  }
  func.func @transform_6(%arg0: i32) -> (i32, i32, i32) {
    %c0_i32 = arith.constant 0 : i32
    %c0_i32_0 = arith.constant 0 : i32
    %c0_i32_1 = arith.constant 0 : i32
    return %arg0, %c0_i32, %c0_i32_0 : i32, i32, i32
  }
}

</mosaic_0001>

<llo_original>
// kernel: tpu_custom_call.1
$region0: #{tpu_custom_call.1}
  #allocation0 [shape = 'u32[]', space=smem, size = 0x4, offset = 0x4, fixed_abs, tag = 'smem constant byte address 0x4 - core index']
  #allocation1 [shape = 'u32[144,128]{1,0:T(1,128)}', space=vmem, size = 0x12000, scoped, tag = 'internal scratch']
  %s0 = inlined_call_operand.hbm [shape: f32[2,4,256], index: 0, kind: input, shape index: {}]
  %s1 = inlined_call_operand.vmem [shape: s32[2,256], index: 1, kind: input, shape index: {}]
  %s2 = inlined_call_operand.vmem [shape: f32[4,36], index: 2, kind: input, shape index: {}]
  %s3 = inlined_call_operand.vmem [shape: f32[4,1], index: 3, kind: input, shape index: {}]
  %s4 = inlined_call_operand.vmem [shape: f32[4,36], index: 4, kind: input, shape index: {}]
  %s5 = inlined_call_operand.vmem [shape: f32[4,1], index: 5, kind: input, shape index: {}]
  %s6 = inlined_call_operand.hbm [shape: f32[2,4,256], index: 6, kind: output, shape index: {}]
  %s7 = sld [smem:[#allocation0]]
  $region61: #{tpu_custom_call.1} parent=0
    _
  %s9 = ssub.s32 1, %s7
  %s10 = scalar_select 0, %s9, %s7
  $region1: #{tpu_custom_call.1} parent=0
    #allocation2 [shape = 'u8[8192]{0}', space=vmem, size = 0x2000, scoped, tag = 'input window, operand 0']
    #allocation3 [shape = 's32[2]{0}', space=sflag, size = 0x8, scoped, tag = 'scoped memory for tpu_custom_call.1']
    #allocation4 [shape = 's32[2]{0}', space=sflag, size = 0x8, scoped, tag = 'scoped memory for tpu_custom_call.1']
    #allocation5 [shape = 'u8[8192]{0}', space=vmem, size = 0x2000, scoped, tag = 'output window, operand 0']
    %11 = vsyncpa [#allocation3], 0
    %s12 = scalar_lea.sflag [#allocation3], 1
    %13 = vsyncpa %s12, 0
    %14 = vsyncpa [#allocation4], 0
    %s15 = scalar_lea.sflag [#allocation4], 1
    %16 = vsyncpa %s15, 0
    loop: start=0, step=1, limit=4
    $region2: #{tpu_custom_call.1} parent=1 // loop_pre_header
      _
    $region3: #{tpu_custom_call.1} parent=1 // loop_header
      %s18 = sphi 0, %s22
      %p19 = scmp.ge.s32.totalorder %s18, 4
      %s28 = sphi 0, %s30
      %s31 = sphi 0, %s28
      %s32 = sphi 0, %s31
      %s48 = sphi 0, %s32
      %s52 = sphi 0, %s52
      %s54 = sphi 0, %s52
      %s55 = sphi 0, %s54
      %s69 = sphi 0, %s55
      %s73 = sphi 0, %s73
      %s75 = sphi 0, %s73
      %s76 = sphi 0, %s75
      %s90 = sphi 0, %s76
      %s94 = sphi 0, %s94
      %s96 = sphi 0, %s94
      %s97 = sphi 0, %s96
      %s111 = sphi 0, %s97
      %s115 = sphi 0, %s115
      %s117 = sphi 0, %s115
      %s118 = sphi 0, %s117
      %s132 = sphi 0, %s118
      %s136 = sphi 0, %s136
      %s138 = sphi 0, %s136
      %s139 = sphi 0, %s138
      %s153 = sphi 0, %s139
      %s159 = sphi 0, %s161
      %s162 = sphi 0, %s159
      %s163 = sphi 0, %s162
      %s179 = sphi 0, %s163
    $region4: #{tpu_custom_call.1} parent=1 // loop_header_branch
      %21 = sbr.rel (%p19) target = $region8
    $region5: #{tpu_custom_call.1} parent=1 // loop_body
      %s23 = ssub.s32 %s18, 1
      %s24 = ssub.s32 %s18, 2
      %s25 = sadd.s32 %s18, 1
      %s26 = ssub.s32 %s18, %s25
      %p27 = scmp.eq.s32.totalorder %s26, 0
      %s29 = sadd.s32 %s28, 1
      %s30 = scalar_select %p27, %s28, %s29
      %p33 = pneg %p27
      %p34 = scmp.eq.s32.totalorder %s18, 1
      %p35 = por %p33, %p34
      %p36 = scmp.ne.s32.totalorder %s28, %s31
      %p37 = scmp.eq.s32.totalorder %s18, 0
      %p38 = por %p36, %p37
      %p39 = scmp.ne.s32.totalorder %s28, %s31
      %p40 = scmp.eq.s32.totalorder %s23, 1
      %p41 = por %p39, %p40
      %p42 = scmp.ne.s32.totalorder %s31, %s32
      %p43 = scmp.eq.s32.totalorder %s23, 0
      %p44 = por %p42, %p43
      %p45 = scmp.ne.s32.totalorder %s31, %s32
      %p46 = scmp.eq.s32.totalorder %s24, 1
      %p47 = por %p45, %p46
      %p49 = scmp.ne.s32.totalorder %s32, %s48
      %p50 = scmp.eq.s32.totalorder %s24, 0
      %p51 = por %p49, %p50
      %s53 = sadd.s32 %s52, 1
      %p56 = scmp.eq.s32.totalorder %s18, 1
      %p57 = scmp.ne.s32.totalorder %s52, %s54
      %p58 = scmp.eq.s32.totalorder %s18, 0
      %p59 = por %p57, %p58
      %p60 = scmp.ne.s32.totalorder %s52, %s54
      %p61 = scmp.eq.s32.totalorder %s23, 1
      %p62 = por %p60, %p61
      %p63 = scmp.ne.s32.totalorder %s54, %s55
      %p64 = scmp.eq.s32.totalorder %s23, 0
      %p65 = por %p63, %p64
      %p66 = scmp.ne.s32.totalorder %s54, %s55
      %p67 = scmp.eq.s32.totalorder %s24, 1
      %p68 = por %p66, %p67
      %p70 = scmp.ne.s32.totalorder %s55, %s69
      %p71 = scmp.eq.s32.totalorder %s24, 0
      %p72 = por %p70, %p71
      %s74 = sadd.s32 %s73, 1
      %p77 = scmp.eq.s32.totalorder %s18, 1
      %p78 = scmp.ne.s32.totalorder %s73, %s75
      %p79 = scmp.eq.s32.totalorder %s18, 0
      %p80 = por %p78, %p79
      %p81 = scmp.ne.s32.totalorder %s73, %s75
      %p82 = scmp.eq.s32.totalorder %s23, 1
      %p83 = por %p81, %p82
      %p84 = scmp.ne.s32.totalorder %s75, %s76
      %p85 = scmp.eq.s32.totalorder %s23, 0
      %p86 = por %p84, %p85
      %p87 = scmp.ne.s32.totalorder %s75, %s76
      %p88 = scmp.eq.s32.totalorder %s24, 1
      %p89 = por %p87, %p88
      %p91 = scmp.ne.s32.totalorder %s76, %s90
      %p92 = scmp.eq.s32.totalorder %s24, 0
      %p93 = por %p91, %p92
      %s95 = sadd.s32 %s94, 1
      %p98 = scmp.eq.s32.totalorder %s18, 1
      %p99 = scmp.ne.s32.totalorder %s94, %s96
      %p100 = scmp.eq.s32.totalorder %s18, 0
      %p101 = por %p99, %p100
      %p102 = scmp.ne.s32.totalorder %s94, %s96
      %p103 = scmp.eq.s32.totalorder %s23, 1
      %p104 = por %p102, %p103
      %p105 = scmp.ne.s32.totalorder %s96, %s97
      %p106 = scmp.eq.s32.totalorder %s23, 0
      %p107 = por %p105, %p106
      %p108 = scmp.ne.s32.totalorder %s96, %s97
      %p109 = scmp.eq.s32.totalorder %s24, 1
      %p110 = por %p108, %p109
      %p112 = scmp.ne.s32.totalorder %s97, %s111
      %p113 = scmp.eq.s32.totalorder %s24, 0
      %p114 = por %p112, %p113
      %s116 = sadd.s32 %s115, 1
      %p119 = scmp.eq.s32.totalorder %s18, 1
      %p120 = scmp.ne.s32.totalorder %s115, %s117
      %p121 = scmp.eq.s32.totalorder %s18, 0
      %p122 = por %p120, %p121
      %p123 = scmp.ne.s32.totalorder %s115, %s117
      %p124 = scmp.eq.s32.totalorder %s23, 1
      %p125 = por %p123, %p124
      %p126 = scmp.ne.s32.totalorder %s117, %s118
      %p127 = scmp.eq.s32.totalorder %s23, 0
      %p128 = por %p126, %p127
      %p129 = scmp.ne.s32.totalorder %s117, %s118
      %p130 = scmp.eq.s32.totalorder %s24, 1
      %p131 = por %p129, %p130
      %p133 = scmp.ne.s32.totalorder %s118, %s132
      %p134 = scmp.eq.s32.totalorder %s24, 0
      %p135 = por %p133, %p134
      %s137 = sadd.s32 %s136, 1
      %p140 = scmp.eq.s32.totalorder %s18, 1
      %p141 = scmp.ne.s32.totalorder %s136, %s138
      %p142 = scmp.eq.s32.totalorder %s18, 0
      %p143 = por %p141, %p142
      %p144 = scmp.ne.s32.totalorder %s136, %s138
      %p145 = scmp.eq.s32.totalorder %s23, 1
      %p146 = por %p144, %p145
      %p147 = scmp.ne.s32.totalorder %s138, %s139
      %p148 = scmp.eq.s32.totalorder %s23, 0
      %p149 = por %p147, %p148
      %p150 = scmp.ne.s32.totalorder %s138, %s139
      %p151 = scmp.eq.s32.totalorder %s24, 1
      %p152 = por %p150, %p151
      %p154 = scmp.ne.s32.totalorder %s139, %s153
      %p155 = scmp.eq.s32.totalorder %s24, 0
      %p156 = por %p154, %p155
      %s157 = ssub.s32 %s18, %s25
      %p158 = scmp.eq.s32.totalorder %s157, 0
      %s160 = sadd.s32 %s159, 1
      %s161 = scalar_select %p158, %s159, %s160
      %p164 = pneg %p158
      %p165 = scmp.eq.s32.totalorder %s18, 1
      %p166 = por %p164, %p165
      %p167 = scmp.ne.s32.totalorder %s159, %s162
      %p168 = scmp.eq.s32.totalorder %s18, 0
      %p169 = por %p167, %p168
      %p170 = scmp.ne.s32.totalorder %s159, %s162
      %p171 = scmp.eq.s32.totalorder %s23, 1
      %p172 = por %p170, %p171
      %p173 = scmp.ne.s32.totalorder %s162, %s163
      %p174 = scmp.eq.s32.totalorder %s23, 0
      %p175 = por %p173, %p174
      %p176 = scmp.ne.s32.totalorder %s162, %s163
      %p177 = scmp.eq.s32.totalorder %s24, 1
      %p178 = por %p176, %p177
      %p180 = scmp.ne.s32.totalorder %s163, %s179
      %p181 = scmp.eq.s32.totalorder %s24, 0
      %p182 = por %p180, %p181
      %p183 = scmp.le.s32.totalorder 1, %s18
      %p184 = scmp.lt.s32.totalorder %s18, 3
      %p185 = pnand %p183, %p184
      %p186 = pneg %p185
      // Predicated region
      $region9: #{tpu_custom_call.1} parent=5 // pred_check
        _
      $region10: #{tpu_custom_call.1} parent=5 // pred_check_branch
        %188 = sbr.rel (%p185) target = $region12
      $region11: #{tpu_custom_call.1} parent=5 // pred_region
        %s189 = ssub.s32 %s18, 1
        // Predicated region
        $region13: #{tpu_custom_call.1} parent=11 // pred_check
          %p190 = pneg %p65
        $region14: #{tpu_custom_call.1} parent=11 // pred_check_branch
          %192 = sbr.rel (%p190) target = $region16
        $region15: #{tpu_custom_call.1} parent=11 // pred_region
          _
        $region16: #{tpu_custom_call.1} parent=11 // pred_fallthru
          _
        // Predicated region
        $region17: #{tpu_custom_call.1} parent=11 // pred_check
          %p193 = pneg %p86
        $region18: #{tpu_custom_call.1} parent=11 // pred_check_branch
          %195 = sbr.rel (%p193) target = $region20
        $region19: #{tpu_custom_call.1} parent=11 // pred_region
          _
        $region20: #{tpu_custom_call.1} parent=11 // pred_fallthru
          _
        // Predicated region
        $region21: #{tpu_custom_call.1} parent=11 // pred_check
          %p196 = pneg %p107
        $region22: #{tpu_custom_call.1} parent=11 // pred_check_branch
          %198 = sbr.rel (%p196) target = $region24
        $region23: #{tpu_custom_call.1} parent=11 // pred_region
          _
        $region24: #{tpu_custom_call.1} parent=11 // pred_fallthru
          _
        // Predicated region
        $region25: #{tpu_custom_call.1} parent=11 // pred_check
          %p199 = pneg %p128
        $region26: #{tpu_custom_call.1} parent=11 // pred_check_branch
          %201 = sbr.rel (%p199) target = $region28
        $region27: #{tpu_custom_call.1} parent=11 // pred_region
          _
        $region28: #{tpu_custom_call.1} parent=11 // pred_fallthru
          _
        // Predicated region
        $region29: #{tpu_custom_call.1} parent=11 // pred_check
          %p202 = pneg %p149
        $region30: #{tpu_custom_call.1} parent=11 // pred_check_branch
          %204 = sbr.rel (%p202) target = $region32
        $region31: #{tpu_custom_call.1} parent=11 // pred_region
          _
        $region32: #{tpu_custom_call.1} parent=11 // pred_fallthru
          _
      $region12: #{tpu_custom_call.1} parent=5 // pred_fallthru
        _
      %p205 = scmp.lt.s32.totalorder %s18, 2
      // Predicated region
      $region33: #{tpu_custom_call.1} parent=5 // pred_check
        %p206 = pneg %p205
      $region34: #{tpu_custom_call.1} parent=5 // pred_check_branch
        %208 = sbr.rel (%p206) target = $region36
      $region35: #{tpu_custom_call.1} parent=5 // pred_region
        // Predicated region
        $region37: #{tpu_custom_call.1} parent=35 // pred_check
          %p209 = pneg %p38
        $region38: #{tpu_custom_call.1} parent=35 // pred_check_branch
          %211 = sbr.rel (%p209) target = $region40
        $region39: #{tpu_custom_call.1} parent=35 // pred_region
          %s212 = sand.u32 %s28, 1
          %s213 = scalar_lea.sflag [#allocation3], %s212
          %s214 = sand.u32 %s28, 1
          %s215 = smul.addr %s214, 8
          %s216 = scalar_lea.vmem [#allocation2], %s215
          %s218 = ssub.s32 128, 128
          %219 = vsyncadd %s213, %s218
          %s220 = smul.addr %s18, 2
          %s221 = smul.addr %s220, 64
          %s222 = scalar_lea.hbm %s0, %s221
          %s224 = sshll.u32 %s216, 4
          %s225 = int_to_ptr.vmem [resolvable:$true] %s224
          %227 = dma.hbm_to_vmem [thread:$0]  %s222, 128, %s225, %s213
        $region40: #{tpu_custom_call.1} parent=35 // pred_fallthru
          _
      $region36: #{tpu_custom_call.1} parent=5 // pred_fallthru
        _
      %p228 = scmp.le.s32.totalorder 1, %s18
      %p229 = scmp.lt.s32.totalorder %s18, 3
      %p230 = pnand %p228, %p229
      %p231 = pneg %p230
      // Predicated region
      $region41: #{tpu_custom_call.1} parent=5 // pred_check
        _
      $region42: #{tpu_custom_call.1} parent=5 // pred_check_branch
        %233 = sbr.rel (%p230) target = $region44
      $region43: #{tpu_custom_call.1} parent=5 // pred_region
        %s234 = ssub.s32 %s18, 1
        %s235 = sand.u32 %s31, 1
        %s236 = scalar_lea.sflag [#allocation3], %s235
        %s237 = sand.u32 %s31, 1
        %s238 = smul.addr %s237, 8
        %s239 = scalar_lea.vmem [#allocation2], %s238
        // Predicated region
        $region45: #{tpu_custom_call.1} parent=43 // pred_check
          %p240 = pneg %p44
        $region46: #{tpu_custom_call.1} parent=43 // pred_check_branch
          %242 = sbr.rel (%p240) target = $region48
        $region47: #{tpu_custom_call.1} parent=43 // pred_region
          %243 = dma.done %s236, 128
        $region48: #{tpu_custom_call.1} parent=43 // pred_fallthru
          _
        %s244 = sand.u32 %s31, 1
        %s245 = scalar_lea.sflag [#allocation3], %s244
        %s246 = sand.u32 %s31, 1
        %s247 = smul.addr %s246, 8
        %s248 = scalar_lea.vmem [#allocation2], %s247
        %p249 = pneg %p44
        %p250 = pneg %p41
        %p251 = pneg %p65
        %p252 = pneg %p62
        %p253 = pneg %p86
        %p254 = pneg %p83
        %p255 = pneg %p107
        %p256 = pneg %p104
        %p257 = pneg %p128
        %p258 = pneg %p125
        %p259 = pneg %p149
        %p260 = pneg %p146
        %p261 = pneg %p175
        %p262 = pneg %p172
        %s263 = sand.u32 %s162, 1
        %s264 = scalar_lea.sflag [#allocation4], %s263
        %s265 = sand.u32 %s162, 1
        %s266 = smul.addr %s265, 8
        %s267 = scalar_lea.vmem [#allocation5], %s266
        %v268 = vld [vmem:[%s239] sm:$0xff]
        %v269 = vld [vmem:[%s1] ss:$2 sm:$0x3]
        %s270 = scalar_lea.vmem %s1, 1
        %v271 = vld [vmem:[%s270] ss:$2 sm:$0x3]
        %vm272 = vcmp.eq.s32.totalorder %v269, 0
        %vm273 = vcmp.eq.s32.totalorder %v269, 15
        %vm274 = vcmp.eq.s32.totalorder %v271, 0
        %vm275 = vcmp.eq.s32.totalorder %v271, 15
        %v277 = vcombine.high %v268, %v268
        %279 = vrot.lane.b32.xlu0 %v268, 16
        %v280 = vpop.permute.xlu0 %279
        %281 = vrot.lane.b32.xlu0 %v277, 16
        %v282 = vpop.permute.xlu0 %281
        %v283 = vlaneseq
        %v284 = vand.u32 %v283, 127
        %vm285 = vcmp.lt.s32.totalorder %v284, 16
        %v286 = vsel %vm285, %v280, %v282
        %v287 = vsel %vm285, %v282, %v280
        %288 = vrot.lane.b32.xlu0 %v268, 112
        %v289 = vpop.permute.xlu0 %288
        %290 = vrot.lane.b32.xlu0 %v277, 112
        %v291 = vpop.permute.xlu0 %290
        %vm292 = vcmp.lt.s32.totalorder %v284, 112
        %v293 = vsel %vm292, %v289, %v291
        %v294 = vsel %vm292, %v291, %v289
        %v295 = vsel %vm272, 1, 0
        %v296 = vlaneseq
        %v297 = vshrl.u32 %v296, 7
        %v298 = vsub.s32 0, %v297
        %v299 = vrot.slane %v295, %v298
        %v300 = vlaneseq
        %v301 = vshrl.u32 %v300, 7
        %v302 = vsub.s32 1, %v301
        %v303 = vrot.slane %v295, %v302
        %vm304 = vcmp.eq.s32.totalorder %v299, 1
        %vm305 = vcmp.eq.s32.totalorder %v303, 1
        %v306 = vsel %vm304, %v293, %v287
        %v307 = vsel %vm305, %v294, %v286
        %v308 = vsel %vm273, 1, 0
        %v309 = vlaneseq
        %v310 = vshrl.u32 %v309, 7
        %v311 = vsub.s32 0, %v310
        %v312 = vrot.slane %v308, %v311
        %v313 = vlaneseq
        %v314 = vshrl.u32 %v313, 7
        %v315 = vsub.s32 1, %v314
        %v316 = vrot.slane %v308, %v315
        %vm317 = vcmp.eq.s32.totalorder %v312, 1
        %vm318 = vcmp.eq.s32.totalorder %v316, 1
        %v319 = vsel %vm317, %v287, %v293
        %v320 = vsel %vm318, %v286, %v294
        %321 = vrot.lane.b32.xlu0 %v306, 1
        %v322 = vpop.permute.xlu0 %321
        %323 = vrot.lane.b32.xlu0 %v307, 1
        %v324 = vpop.permute.xlu0 %323
        %vm325 = vcmp.lt.s32.totalorder %v284, 1
        %v326 = vsel %vm325, %v322, %v324
        %v327 = vsel %vm325, %v324, %v322
        %328 = vrot.lane.b32.xlu0 %v306, 127
        %v329 = vpop.permute.xlu0 %328
        %330 = vrot.lane.b32.xlu0 %v307, 127
        %v331 = vpop.permute.xlu0 %330
        %vm332 = vcmp.lt.s32.totalorder %v284, 127
        %v333 = vsel %vm332, %v329, %v331
        %v334 = vsel %vm332, %v331, %v329
        %v335 = vsel %vm274, 1, 0
        %v336 = vlaneseq
        %v337 = vshrl.u32 %v336, 7
        %v338 = vsub.s32 0, %v337
        %v339 = vrot.slane %v335, %v338
        %v340 = vlaneseq
        %v341 = vshrl.u32 %v340, 7
        %v342 = vsub.s32 1, %v341
        %v343 = vrot.slane %v335, %v342
        %vm344 = vcmp.eq.s32.totalorder %v339, 1
        %vm345 = vcmp.eq.s32.totalorder %v343, 1
        %v346 = vsel %vm344, %v333, %v327
        %v347 = vsel %vm345, %v334, %v326
        %v348 = vsel %vm275, 1, 0
        %v349 = vlaneseq
        %v350 = vshrl.u32 %v349, 7
        %v351 = vsub.s32 0, %v350
        %v352 = vrot.slane %v348, %v351
        %v353 = vlaneseq
        %v354 = vshrl.u32 %v353, 7
        %v355 = vsub.s32 1, %v354
        %v356 = vrot.slane %v348, %v355
        %vm357 = vcmp.eq.s32.totalorder %v352, 1
        %vm358 = vcmp.eq.s32.totalorder %v356, 1
        %v359 = vsel %vm357, %v327, %v333
        %v360 = vsel %vm358, %v326, %v334
        %361 = vrot.lane.b32.xlu0 %v268, 1
        %v362 = vpop.permute.xlu0 %361
        %363 = vrot.lane.b32.xlu0 %v277, 1
        %v364 = vpop.permute.xlu0 %363
        %v365 = vsel %vm325, %v362, %v364
        %v366 = vsel %vm325, %v364, %v362
        %367 = vrot.lane.b32.xlu0 %v268, 127
        %v368 = vpop.permute.xlu0 %367
        %369 = vrot.lane.b32.xlu0 %v277, 127
        %v370 = vpop.permute.xlu0 %369
        %v371 = vsel %vm332, %v368, %v370
        %v372 = vsel %vm332, %v370, %v368
        %v373 = vsel %vm344, %v371, %v366
        %v374 = vsel %vm345, %v372, %v365
        %v375 = vsel %vm357, %v366, %v371
        %v376 = vsel %vm358, %v365, %v372
        %377 = vrot.lane.b32.xlu0 %v319, 1
        %v378 = vpop.permute.xlu0 %377
        %379 = vrot.lane.b32.xlu0 %v320, 1
        %v380 = vpop.permute.xlu0 %379
        %v381 = vsel %vm325, %v378, %v380
        %v382 = vsel %vm325, %v380, %v378
        %383 = vrot.lane.b32.xlu0 %v319, 127
        %v384 = vpop.permute.xlu0 %383
        %385 = vrot.lane.b32.xlu0 %v320, 127
        %v386 = vpop.permute.xlu0 %385
        %v387 = vsel %vm332, %v384, %v386
        %v388 = vsel %vm332, %v386, %v384
        %v389 = vsel %vm344, %v387, %v382
        %v390 = vsel %vm345, %v388, %v381
        %v391 = vsel %vm357, %v382, %v387
        %v392 = vsel %vm358, %v381, %v388
        %v395 = vrot.slane %v306, 4
        %v396 = vrot.slane %v307, 4
        %v401 = vrot.slane %v373, 4
        %v402 = vrot.slane %v374, 4
        %v407 = vrot.slane %v375, 4
        %v408 = vrot.slane %v376, 4
        %v413 = vrot.slane %v319, 4
        %v414 = vrot.slane %v320, 4
        %vm417 = vcmask 1043456
        %v418 = vsel %vm417, %v346, %v395
        %v419 = vsel %vm417, %v347, %v396
        %v420 = vsel %vm417, %v359, %v401
        %v421 = vsel %vm417, %v360, %v402
        %v422 = vsel %vm417, %v268, %v407
        %v423 = vsel %vm417, %v277, %v408
        %v424 = vsel %vm417, %v389, %v413
        %v425 = vsel %vm417, %v390, %v414
        %v426 = vld [vmem:[%s2] sm:$0xf]
        %v427 = vld [vmem:[%s3] sm:$0xf]
        %429 = vset.pattern.permute.xlu0 0
        %430 = vperm.xlu0 %429, %v427
        %v431 = vpop.permute.xlu0 %430
        %vm433 = vcmask 293888
        %v435 = vsel %vm433, %v426, 0
        %v438 = vsel %vm417, %v391, 0
        %v441 = vsel %vm417, %v392, 0
        %443 = vmatprep.subr.mxu0 %v419
        %444 = vmatpush1.msra.mxu0 %v418
        %445 = vmatprep.subr.mxu0 %v421
        %446 = vmatpush1.msra.mxu0 %v420
        %447 = vmatprep.subr.mxu0 %v423
        %448 = vmatpush1.msra.mxu0 %v422
        %449 = vmatprep.subr.mxu0 %v425
        %450 = vmatpush1.msra.mxu0 %v424
        %451 = vmatprep.subr.mxu0 %v441
        %452 = vmatpush1.msra.mxu0 %v438
        %453 = vmatprep.subr.mxu0 0.0
        %454 = vmatpush1.msra.mxu0 0.0
        %455 = vmatprep.subr.mxu0 0.0
        %456 = vmatpush1.msra.mxu0 0.0
        %457 = vmatprep.subr.mxu0 0.0
        %458 = vmatpush1.msra.mxu0 0.0
        %459 = vmatprep.subr.mxu0 0.0
        %460 = vmatpush1.msra.mxu0 0.0
        %461 = vmatprep.subr.mxu0 0.0
        %462 = vmatpush1.msra.mxu0 0.0
        %463 = vmatprep.subr.mxu0 0.0
        %464 = vmatpush1.msra.mxu0 0.0
        %465 = vmatprep.subr.mxu0 0.0
        %466 = vmatpush1.msra.mxu0 0.0
        %467 = vmatprep.subr.mxu0 0.0
        %468 = vmatpush1.msra.mxu0 0.0
        %469 = vmatprep.subr.mxu0 0.0
        %470 = vmatpush1.msra.mxu0 0.0
        %471 = vmatprep.subr.mxu0 0.0
        %472 = vmatpush1.msra.mxu0 0.0
        %473 = vmatprep.subr.mxu0 0.0
        %474 = vmatpush1.msra.mxu0 0.0
        %475 = vmatprep.subr.mxu0 0.0
        %476 = vmatpush1.msra.mxu0 0.0
        %477 = vmatprep.subr.mxu0 0.0
        %478 = vmatpush1.msra.mxu0 0.0
        %479 = vmatprep.subr.mxu0 0.0
        %480 = vmatpush1.msra.mxu0 0.0
        %481 = vmatprep.subr.mxu0 0.0
        %482 = vmatpush1.msra.mxu0 0.0
        %483 = vmatprep.subr.mxu0 0.0
        %484 = vmatpush1.msra.mxu0 0.0
        %485 = vmatprep.subr.mxu0 0.0
        %486 = vmatpush1.msra.mxu0 0.0
        %487 = vmatprep.subr.mxu0 0.0
        %488 = vmatpush1.msra.mxu0 0.0
        %489 = vmatprep.subr.mxu0 0.0
        %490 = vmatpush1.msra.mxu0 0.0
        %491 = vmatprep.subr.mxu0 0.0
        %492 = vmatpush1.msra.mxu0 0.0
        %493 = vmatprep.subr.mxu0 0.0
        %494 = vmatpush1.msra.mxu0 0.0
        %495 = vmatprep.subr.mxu0 0.0
        %496 = vmatpush1.msra.mxu0 0.0
        %497 = vmatprep.subr.mxu0 0.0
        %498 = vmatpush1.msra.mxu0 0.0
        %499 = vmatprep.subr.mxu0 0.0
        %500 = vmatpush1.msra.mxu0 0.0
        %501 = vmatprep.subr.mxu0 0.0
        %502 = vmatpush1.msra.mxu0 0.0
        %503 = vmatprep.subr.mxu0 0.0
        %504 = vmatpush1.msra.mxu0 0.0
        %505 = vmatprep.subr.mxu0 0.0
        %506 = vmatpush1.msra.mxu0 0.0
        %507 = vmatprep.mubr.f32.mxu0 0.0
        %508 = vmatmul.mubr.f32.gmra.mrb[0].mxu0 %v435
        %v509 = vpop.f32.mrb[0].mxu0
        %v510 = vadd.f32 %v431, %v509
        %v511 = vpop.f32.mrb[0].mxu0
        %v512 = vadd.f32 %v431, %v511
        %513 = vdwg.mxu0
        %v514 = vsel %vm417, %v510, 0.0
        %v515 = vsel %vm417, %v512, 0.0
        %v516 = vadd.f32 %v514, %v515
        %517 = vadd.xlane.f32.xlu0 %v516
        %v518 = vpop.xlane.xlu0 %517
        %v519 = vrcp.pop 256.0
        %v520 = vmul.f32 %v518, %v519
        %v521 = vsub.f32 %v510, %v520
        %v522 = vsub.f32 %v512, %v520
        %v523 = vmul.f32 %v521, %v521
        %v524 = vmul.f32 %v522, %v522
        %v525 = vsel %vm417, %v523, 0.0
        %v526 = vsel %vm417, %v524, 0.0
        %v527 = vadd.f32 %v525, %v526
        %528 = vadd.xlane.f32.xlu0 %v527
        %v529 = vpop.xlane.xlu0 %528
        %v530 = vmul.f32 %v529, %v519
        %v531 = vadd.f32 %v530, 1e-05
        %v532 = vrsqrt.pop %v531
        %v533 = vmul.f32 %v521, %v532
        %v534 = vmul.f32 %v522, %v532
        %v535 = vmax.f32 %v533, 0.0
        %v536 = vmax.f32 %v534, 0.0
        %537 = vrot.lane.b32.xlu0 %v535, 16
        %v538 = vpop.permute.xlu0 %537
        %539 = vrot.lane.b32.xlu0 %v536, 16
        %v540 = vpop.permute.xlu0 %539
        %v541 = vsel %vm285, %v538, %v540
        %v542 = vsel %vm285, %v540, %v538
        %543 = vrot.lane.b32.xlu0 %v535, 112
        %v544 = vpop.permute.xlu0 %543
        %545 = vrot.lane.b32.xlu0 %v536, 112
        %v546 = vpop.permute.xlu0 %545
        %v547 = vsel %vm292, %v544, %v546
        %v548 = vsel %vm292, %v546, %v544
        %v549 = vsel %vm304, %v547, %v542
        %v550 = vsel %vm305, %v548, %v541
        %v551 = vsel %vm317, %v542, %v547
        %v552 = vsel %vm318, %v541, %v548
        %553 = vrot.lane.b32.xlu0 %v549, 1
        %v554 = vpop.permute.xlu0 %553
        %555 = vrot.lane.b32.xlu0 %v550, 1
        %v556 = vpop.permute.xlu0 %555
        %v557 = vsel %vm325, %v554, %v556
        %v558 = vsel %vm325, %v556, %v554
        %559 = vrot.lane.b32.xlu0 %v549, 127
        %v560 = vpop.permute.xlu0 %559
        %561 = vrot.lane.b32.xlu0 %v550, 127
        %v562 = vpop.permute.xlu0 %561
        %v563 = vsel %vm332, %v560, %v562
        %v564 = vsel %vm332, %v562, %v560
        %v565 = vsel %vm344, %v563, %v558
        %v566 = vsel %vm345, %v564, %v557
        %v567 = vsel %vm357, %v558, %v563
        %v568 = vsel %vm358, %v557, %v564
        %569 = vrot.lane.b32.xlu0 %v535, 1
        %v570 = vpop.permute.xlu0 %569
        %571 = vrot.lane.b32.xlu0 %v536, 1
        %v572 = vpop.permute.xlu0 %571
        %v573 = vsel %vm325, %v570, %v572
        %v574 = vsel %vm325, %v572, %v570
        %575 = vrot.lane.b32.xlu0 %v535, 127
        %v576 = vpop.permute.xlu0 %575
        %577 = vrot.lane.b32.xlu0 %v536, 127
        %v578 = vpop.permute.xlu0 %577
        %v579 = vsel %vm332, %v576, %v578
        %v580 = vsel %vm332, %v578, %v576
        %v581 = vsel %vm344, %v579, %v574
        %v582 = vsel %vm345, %v580, %v573
        %v583 = vsel %vm357, %v574, %v579
        %v584 = vsel %vm358, %v573, %v580
        %585 = vrot.lane.b32.xlu0 %v551, 1
        %v586 = vpop.permute.xlu0 %585
        %587 = vrot.lane.b32.xlu0 %v552, 1
        %v588 = vpop.permute.xlu0 %587
        %v589 = vsel %vm325, %v586, %v588
        %v590 = vsel %vm325, %v588, %v586
        %591 = vrot.lane.b32.xlu0 %v551, 127
        %v592 = vpop.permute.xlu0 %591
        %593 = vrot.lane.b32.xlu0 %v552, 127
        %v594 = vpop.permute.xlu0 %593
        %v595 = vsel %vm332, %v592, %v594
        %v596 = vsel %vm332, %v594, %v592
        %v597 = vsel %vm344, %v595, %v590
        %v598 = vsel %vm345, %v596, %v589
        %v599 = vsel %vm357, %v590, %v595
        %v600 = vsel %vm358, %v589, %v596
        %v603 = vrot.slane %v549, 4
        %v604 = vrot.slane %v550, 4
        %v609 = vrot.slane %v581, 4
        %v610 = vrot.slane %v582, 4
        %v615 = vrot.slane %v583, 4
        %v616 = vrot.slane %v584, 4
        %v621 = vrot.slane %v551, 4
        %v622 = vrot.slane %v552, 4
        %v625 = vsel %vm417, %v565, %v603
        %v626 = vsel %vm417, %v566, %v604
        %v627 = vsel %vm417, %v567, %v609
        %v628 = vsel %vm417, %v568, %v610
        %v629 = vsel %vm417, %v535, %v615
        %v630 = vsel %vm417, %v536, %v616
        %v631 = vsel %vm417, %v597, %v621
        %v632 = vsel %vm417, %v598, %v622
        %v633 = vld [vmem:[%s4] sm:$0xf]
        %v634 = vld [vmem:[%s5] sm:$0xf]
        %636 = vset.pattern.permute.xlu0 0
        %637 = vperm.xlu0 %636, %v634
        %v638 = vpop.permute.xlu0 %637
        %v641 = vsel %vm433, %v633, 0
        %v644 = vsel %vm417, %v599, 0
        %v647 = vsel %vm417, %v600, 0
        %649 = vmatprep.subr.mxu0 %v626
        %650 = vmatpush1.msra.mxu0 %v625
        %651 = vmatprep.subr.mxu0 %v628
        %652 = vmatpush1.msra.mxu0 %v627
        %653 = vmatprep.subr.mxu0 %v630
        %654 = vmatpush1.msra.mxu0 %v629
        %655 = vmatprep.subr.mxu0 %v632
        %656 = vmatpush1.msra.mxu0 %v631
        %657 = vmatprep.subr.mxu0 %v647
        %658 = vmatpush1.msra.mxu0 %v644
        %659 = vmatprep.subr.mxu0 0.0
        %660 = vmatpush1.msra.mxu0 0.0
        %661 = vmatprep.subr.mxu0 0.0
        %662 = vmatpush1.msra.mxu0 0.0
        %663 = vmatprep.subr.mxu0 0.0
        %664 = vmatpush1.msra.mxu0 0.0
        %665 = vmatprep.subr.mxu0 0.0
        %666 = vmatpush1.msra.mxu0 0.0
        %667 = vmatprep.subr.mxu0 0.0
        %668 = vmatpush1.msra.mxu0 0.0
        %669 = vmatprep.subr.mxu0 0.0
        %670 = vmatpush1.msra.mxu0 0.0
        %671 = vmatprep.subr.mxu0 0.0
        %672 = vmatpush1.msra.mxu0 0.0
        %673 = vmatprep.subr.mxu0 0.0
        %674 = vmatpush1.msra.mxu0 0.0
        %675 = vmatprep.subr.mxu0 0.0
        %676 = vmatpush1.msra.mxu0 0.0
        %677 = vmatprep.subr.mxu0 0.0
        %678 = vmatpush1.msra.mxu0 0.0
        %679 = vmatprep.subr.mxu0 0.0
        %680 = vmatpush1.msra.mxu0 0.0
        %681 = vmatprep.subr.mxu0 0.0
        %682 = vmatpush1.msra.mxu0 0.0
        %683 = vmatprep.subr.mxu0 0.0
        %684 = vmatpush1.msra.mxu0 0.0
        %685 = vmatprep.subr.mxu0 0.0
        %686 = vmatpush1.msra.mxu0 0.0
        %687 = vmatprep.subr.mxu0 0.0
        %688 = vmatpush1.msra.mxu0 0.0
        %689 = vmatprep.subr.mxu0 0.0
        %690 = vmatpush1.msra.mxu0 0.0
        %691 = vmatprep.subr.mxu0 0.0
        %692 = vmatpush1.msra.mxu0 0.0
        %693 = vmatprep.subr.mxu0 0.0
        %694 = vmatpush1.msra.mxu0 0.0
        %695 = vmatprep.subr.mxu0 0.0
        %696 = vmatpush1.msra.mxu0 0.0
        %697 = vmatprep.subr.mxu0 0.0
        %698 = vmatpush1.msra.mxu0 0.0
        %699 = vmatprep.subr.mxu0 0.0
        %700 = vmatpush1.msra.mxu0 0.0
        %701 = vmatprep.subr.mxu0 0.0
        %702 = vmatpush1.msra.mxu0 0.0
        %703 = vmatprep.subr.mxu0 0.0
        %704 = vmatpush1.msra.mxu0 0.0
        %705 = vmatprep.subr.mxu0 0.0
        %706 = vmatpush1.msra.mxu0 0.0
        %707 = vmatprep.subr.mxu0 0.0
        %708 = vmatpush1.msra.mxu0 0.0
        %709 = vmatprep.subr.mxu0 0.0
        %710 = vmatpush1.msra.mxu0 0.0
        %711 = vmatprep.subr.mxu0 0.0
        %712 = vmatpush1.msra.mxu0 0.0
        %713 = vmatprep.mubr.f32.mxu0 0.0
        %714 = vmatmul.mubr.f32.gmra.mrb[0].mxu0 %v641
        %v715 = vpop.f32.mrb[0].mxu0
        %v716 = vadd.f32 %v638, %v715
        %v717 = vpop.f32.mrb[0].mxu0
        %v718 = vadd.f32 %v638, %v717
        %719 = vdwg.mxu0
        %v720 = vsel %vm417, %v716, 0.0
        %v721 = vsel %vm417, %v718, 0.0
        %v722 = vadd.f32 %v720, %v721
        %723 = vadd.xlane.f32.xlu0 %v722
        %v724 = vpop.xlane.xlu0 %723
        %v725 = vmul.f32 %v724, %v519
        %v726 = vsub.f32 %v716, %v725
        %v727 = vsub.f32 %v718, %v725
        %v728 = vmul.f32 %v726, %v726
        %v729 = vmul.f32 %v727, %v727
        %v730 = vsel %vm417, %v728, 0.0
        %v731 = vsel %vm417, %v729, 0.0
        %v732 = vadd.f32 %v730, %v731
        %733 = vadd.xlane.f32.xlu0 %v732
        %v734 = vpop.xlane.xlu0 %733
        %v735 = vmul.f32 %v734, %v519
        %v736 = vadd.f32 %v735, 1e-05
        %v737 = vrsqrt.pop %v736
        %v738 = vmul.f32 %v726, %v737
        %v739 = vmul.f32 %v727, %v737
        %v742 = vcombine.low %v738, %v739
        %v744 = vadd.f32 %v268, %v742
        %745 = vst [vmem:[%s267] sm:$0xff] %v744
        %s746 = sand.u32 %s162, 1
        %s747 = scalar_lea.sflag [#allocation4], %s746
        %s748 = sand.u32 %s162, 1
        %s749 = smul.addr %s748, 8
        %s750 = scalar_lea.vmem [#allocation5], %s749
        // Predicated region
        $region49: #{tpu_custom_call.1} parent=43 // pred_check
          %p751 = pneg %p172
        $region50: #{tpu_custom_call.1} parent=43 // pred_check_branch
          %753 = sbr.rel (%p751) target = $region52
        $region51: #{tpu_custom_call.1} parent=43 // pred_region
          %s755 = ssub.s32 128, 128
          %756 = vsyncadd %s747, %s755
          %s757 = smul.addr %s23, 2
          %s758 = smul.addr %s757, 64
          %s759 = scalar_lea.hbm %s6, %s758
          %s761 = sshll.u32 %s750, 4
          %s762 = int_to_ptr.vmem [resolvable:$true] %s761
          %764 = dma.vmem_to_hbm [thread:$0]  %s762, 128, %s759, %s747
        $region52: #{tpu_custom_call.1} parent=43 // pred_fallthru
          _
      $region44: #{tpu_custom_call.1} parent=5 // pred_fallthru
        _
      %p765 = scmp.le.s32.totalorder 2, %s18
      // Predicated region
      $region53: #{tpu_custom_call.1} parent=5 // pred_check
        %p766 = pneg %p765
      $region54: #{tpu_custom_call.1} parent=5 // pred_check_branch
        %768 = sbr.rel (%p766) target = $region56
      $region55: #{tpu_custom_call.1} parent=5 // pred_region
        %s769 = ssub.s32 %s18, 2
        // Predicated region
        $region57: #{tpu_custom_call.1} parent=55 // pred_check
          %p770 = pneg %p178
        $region58: #{tpu_custom_call.1} parent=55 // pred_check_branch
          %772 = sbr.rel (%p770) target = $region60
        $region59: #{tpu_custom_call.1} parent=55 // pred_region
          %s773 = sand.u32 %s163, 1
          %s774 = scalar_lea.sflag [#allocation4], %s773
          %s775 = sand.u32 %s163, 1
          %s776 = smul.addr %s775, 8
          %s777 = scalar_lea.vmem [#allocation5], %s776
          %778 = dma.done %s774, 128
        $region60: #{tpu_custom_call.1} parent=55 // pred_fallthru
          _
      $region56: #{tpu_custom_call.1} parent=5 // pred_fallthru
        _
    $region6: #{tpu_custom_call.1} parent=1 // loop_footer
      %s22 = sadd.s32 1, %s18
    $region7: #{tpu_custom_call.1} parent=1 // loop_footer_branch
      %17 = sbr.rel target = $region3
    $region8: #{tpu_custom_call.1} parent=1 // loop_exit
      _
    %779 = vsyncpa [#allocation3], 1
    %s780 = scalar_lea.sflag [#allocation3], 1
    %781 = vsyncpa %s780, 1
    %782 = vsyncpa [#allocation4], 1
    %s783 = scalar_lea.sflag [#allocation4], 1
    %784 = vsyncpa %s783, 1

</llo_original>
